<compile_context>
chip_gen: v7x
topology: tpu7x:2x2x1
jax: 0.10.0
libtpu: 0.0.40
codegen_flags: <defaults>
</compile_context>

<pallas_src>
import functools
import math

import jax
import jax.numpy as jnp
from jax.experimental import pallas as pl
from jax.experimental.pallas import tpu as pltpu

LOGVAR_MAX = 2.0
LOGVAR_MIN = -10.0


def _convdist_kernel(x_ref, wdw_ref, bdw_ref, wmu_ref, bmu_ref, wsd_ref, bsd_ref,
                     mu_ref, var_ref, *, H, W, C):
    # Per grid step:
    #   x_ref   : (Rb, HW)     rows = n*C + c, lanes = h*W + w (lane-dense)
    #   wdw_ref : (Rb, 9)      depthwise 3x3 weight of each row's channel,
    #                          column (di+1)*3 + (dj+1)
    #   bdw_ref : (Rb, 1)      depthwise bias per row
    #   wmu_ref : (Rb, 2C-1)   1x1 'mean' head weight vs sublane offset d,
    #                          zero wherever co+d leaves [0, C)
    #   bmu_ref : (Rb, 1)
    #   wsd_ref : (Rb, 2C-1)   same for the 'std' (logvar) head
    #   bsd_ref : (Rb, 1)
    #   mu_ref  : (Rb, HW)     outputs: full-tile unmasked lane-dense stores
    #   var_ref : (Rb, HW)     (= exp(logvar), the module's Normal scale)
    Rb, HW = x_ref.shape
    x = x_ref[...].astype(jnp.float32)

    # Reflection-pad boundary masks from an in-kernel iota (no extra input DMA).
    flat = jax.lax.broadcasted_iota(jnp.int32, (1, HW), 1)
    col = flat % W
    at_left = col == 0
    at_right = col == (W - 1)
    at_top = flat < W
    at_bot = flat >= (H - 1) * W

    # ---- 9 depthwise-conv taps via lane rolls of the flat spatial axis. -------
    # taps[(di, dj)][r, f] == x[r, (f + di*W + dj) mod HW]; the mod-HW wraps and
    # the +-1 column row-crossings are exactly the positions the reflection
    # selects below overwrite, so no padded scratch buffer is needed.
    taps = {}
    for di in (-1, 0, 1):
        for dj in (-1, 0, 1):
            d = di * W + dj
            taps[(di, dj)] = x if d == 0 else pltpu.roll(x, shift=(-d) % HW, axis=1)

    # Reflection along W: at w==0 the left tap reflects onto the right tap of
    # the same row offset; at w==W-1 the right tap reflects onto the left tap.
    colfix = {}
    for di in (-1, 0, 1):
        left, mid, right = taps[(di, -1)], taps[(di, 0)], taps[(di, 1)]
        colfix[(di, -1)] = jnp.where(at_left, right, left)
        colfix[(di, 0)] = mid
        colfix[(di, 1)] = jnp.where(at_right, left, right)

    # Reflection along H: at h==0 the up taps reflect onto the (column-fixed)
    # down taps and vice versa at h==H-1; the composition handles the corners.
    tap = dict(colfix)
    for dj in (-1, 0, 1):
        tap[(-1, dj)] = jnp.where(at_top, colfix[(1, dj)], colfix[(-1, dj)])
        tap[(1, dj)] = jnp.where(at_bot, colfix[(-1, dj)], colfix[(1, dj)])

    # ---- Depthwise 3x3: 9 sublane-broadcast FMAs over full (Rb, HW) tiles. ----
    acc = None
    for di in (-1, 0, 1):
        for dj in (-1, 0, 1):
            t = (di + 1) * 3 + (dj + 1)
            contrib = tap[(di, dj)] * wdw_ref[:, t:t + 1]
            acc = contrib if acc is None else acc + contrib
    y = acc + bdw_ref[...]

    # ---- Fused 1x1 heads: channel mixing via 2C-1 sublane rolls of y (XLU),
    # shared by both heads, times per-row weight columns.  Out-of-group weights
    # are zero and Rb is a multiple of C, so rolls never leak across groups.
    acc_mu = None
    acc_sd = None
    for idx, d in enumerate(range(-(C - 1), C)):
        yd = y if d == 0 else pltpu.roll(y, shift=(-d) % Rb, axis=0)
        cmu = yd * wmu_ref[:, idx:idx + 1]
        csd = yd * wsd_ref[:, idx:idx + 1]
        acc_mu = cmu if acc_mu is None else acc_mu + cmu
        acc_sd = csd if acc_sd is None else acc_sd + csd

    mu = acc_mu + bmu_ref[...]
    lv = jnp.tanh(acc_sd + bsd_ref[...])
    lv = LOGVAR_MIN + 0.5 * (LOGVAR_MAX - LOGVAR_MIN) * (lv + 1.0)
    mu_ref[...] = mu.astype(mu_ref.dtype)
    # Matches the module: var = exp(logvar) is what Normal(mu, var) receives.
    var_ref[...] = jnp.exp(lv).astype(var_ref.dtype)


def conv_dist_layer(x, params, *, io_dtype=jnp.float32):
    """ConvDistLayer forward. Returns (mu, var) with var = exp(logvar).

    io_dtype: HBM-facing dtype for x/mu/var (bf16 is an option on v6e/v7x;
    accumulation is always f32 in-kernel).
    """
    N, C, H, W = x.shape
    if H < 2 or W < 2:
        raise ValueError("ReflectionPad2d(1) requires H, W >= 2")
    HW = H * W
    R = N * C

    # ---- Row-block sizing ------------------------------------------------------
    # Blocks are k * L rows with L = lcm(8, C): multiple of 8 for dense sublanes,
    # multiple of C so (n, c)-groups never straddle a block (needed by the head
    # rolls).  Target ~1 MiB of input per block, keep the grid >= 2 when there is
    # enough work (pipelining + both v7x TensorCores), pad R with zero rows
    # instead of shrinking blocks.
    L = (8 * C) // math.gcd(8, C)
    groups_total = -(-R // L)                             # ceil(R / L)
    groups_1mib = max(1, (1 << 20) // (L * HW * 4))
    k = min(groups_total, groups_1mib)
    if groups_total >= 2:
        k = min(k, max(1, groups_total // 2))             # grid length >= 2
    Rb = k * L
    num_blocks = -(-groups_total // k)
    R_pad = num_blocks * Rb
    # Per-block VMEM (double-buffered in + 2 outs) ~ 6 * Rb * HW * 4 B; with the
    # ~1 MiB cap this stays a few MiB, well inside v7x's 64 MiB VMEM (32 MiB
    # default scoped limit), so no vmem_limit_bytes override is needed.

    # ---- Inputs ----------------------------------------------------------------
    xf = x.reshape(R, HW).astype(io_dtype)
    if R_pad != R:
        xf = jnp.pad(xf, ((0, R_pad - R), (0, 0)))

    rows = jnp.arange(R_pad)
    row_c = rows % C                                      # channel of each row
    valid = (rows < R)[:, None]

    f32 = jnp.float32
    w_dw = params["w_dw"].astype(f32).reshape(C, 9)       # (C,1,3,3) -> [c, ki*3+kj]
    b_dw = params["b_dw"].astype(f32)
    w_mu = params["w_mu"].astype(f32).reshape(C, C)       # (C,C,1,1) -> [co, ci]
    b_mu = params["b_mu"].astype(f32)
    w_sd = params["w_sd"].astype(f32).reshape(C, C)
    b_sd = params["b_sd"].astype(f32)

    wdw_rows = jnp.where(valid, w_dw[row_c], 0.0)                 # (R_pad, 9)
    bdw_rows = jnp.where(valid, b_dw[row_c][:, None], 0.0)        # (R_pad, 1)
    bmu_rows = jnp.where(valid, b_mu[row_c][:, None], 0.0)
    bsd_rows = jnp.where(valid, b_sd[row_c][:, None], 0.0)

    # 1x1-head weight tables indexed by sublane offset d = -(C-1)..(C-1):
    # tab[r, idx] = W[c, c + d] if 0 <= c + d < C else 0, with c = r % C.
    offs = jnp.arange(-(C - 1), C)
    ci = row_c[:, None] + offs[None, :]
    inb = (ci >= 0) & (ci < C) & valid
    ci_c = jnp.clip(ci, 0, C - 1)
    wmu_tab = jnp.where(inb, w_mu[row_c[:, None], ci_c], 0.0)     # (R_pad, 2C-1)
    wsd_tab = jnp.where(inb, w_sd[row_c[:, None], ci_c], 0.0)

    rows_map = lambda i: (i, 0)
    in_specs = [
        pl.BlockSpec((Rb, HW), rows_map),           # x (lane-dense)
        pl.BlockSpec((Rb, 9), rows_map),            # depthwise weight per row
        pl.BlockSpec((Rb, 1), rows_map),            # depthwise bias per row
        pl.BlockSpec((Rb, 2 * C - 1), rows_map),    # mu head table per row
        pl.BlockSpec((Rb, 1), rows_map),            # mu bias per row
        pl.BlockSpec((Rb, 2 * C - 1), rows_map),    # logvar head table per row
        pl.BlockSpec((Rb, 1), rows_map),            # logvar bias per row
    ]
    out_specs = (
        pl.BlockSpec((Rb, HW), rows_map),           # mu  (full-tile stores)
        pl.BlockSpec((Rb, HW), rows_map),           # var (full-tile stores)
    )

    kernel = functools.partial(_convdist_kernel, H=H, W=W, C=C)
    mu, var = pl.pallas_call(
        kernel,
        out_shape=(
            jax.ShapeDtypeStruct((R_pad, HW), io_dtype),
            jax.ShapeDtypeStruct((R_pad, HW), io_dtype),
        ),
        grid_spec=pltpu.PrefetchScalarGridSpec(
            num_scalar_prefetch=0,
            grid=(num_blocks,),
            in_specs=in_specs,
            out_specs=out_specs,
        ),
        compiler_params=pltpu.CompilerParams(
            # Row blocks are independent: shards across v7x's two TensorCores,
            # harmless on single-TC v5e/v6e.
            dimension_semantics=("parallel",),
        ),
    )(xf, wdw_rows, bdw_rows, wmu_tab, bmu_rows, wsd_tab, bsd_rows)

    mu = mu[:R].reshape(N, C, H, W)
    var = var[:R].reshape(N, C, H, W)
    return mu, var


def reference(x, params):
    """Pure-JAX reference matching the PyTorch forward."""
    C = x.shape[1]
    dn = ("NCHW", "OIHW", "NCHW")
    xp = jnp.pad(x, ((0, 0), (0, 0), (1, 1), (1, 1)), mode="reflect")
    y = jax.lax.conv_general_dilated(
        xp, params["w_dw"], (1, 1), "VALID",
        feature_group_count=C, dimension_numbers=dn
    ) + params["b_dw"][None, :, None, None]
    mu = jax.lax.conv_general_dilated(
        y, params["w_mu"], (1, 1), "VALID", dimension_numbers=dn
    ) + params["b_mu"][None, :, None, None]
    lv = jax.lax.conv_general_dilated(
        y, params["w_sd"], (1, 1), "VALID", dimension_numbers=dn
    ) + params["b_sd"][None, :, None, None]
    lv = jnp.tanh(lv)
    lv = LOGVAR_MIN + 0.5 * (LOGVAR_MAX - LOGVAR_MIN) * (lv + 1.0)
    return mu, jnp.exp(lv)


if __name__ == "__main__":
    # N=4 so N*C=16 rows -> two 8-row blocks -> grid=(2,) exercises pipelining
    # and v7x dual-TensorCore sharding even at this toy size.
    N, C, H, W = 4, 4, 16, 16

    key = jax.random.PRNGKey(0)
    kx, k1, k2, k3, k4, k5, k6 = jax.random.split(key, 7)
    x = jax.random.normal(kx, (N, C, H, W), jnp.float32)

    # Deterministic synthetic parameters (PyTorch Conv2d weight/bias shapes).
    params = {
        "w_dw": jax.random.normal(k1, (C, 1, 3, 3), jnp.float32) * 0.3,  # depthwise, groups=C
        "b_dw": jax.random.normal(k2, (C,), jnp.float32) * 0.1,
        "w_mu": jax.random.normal(k3, (C, C, 1, 1), jnp.float32) * 0.3,
        "b_mu": jax.random.normal(k4, (C,), jnp.float32) * 0.1,
        "w_sd": jax.random.normal(k5, (C, C, 1, 1), jnp.float32) * 0.3,
        "b_sd": jax.random.normal(k6, (C,), jnp.float32) * 0.1,
    }

    mu, scale = conv_dist_layer(x, params)
    jax.block_until_ready((mu, scale))

    mu_ref, scale_ref = reference(x, params)
    assert jnp.allclose(mu, mu_ref, atol=1e-4, rtol=1e-4), "mu mismatch"
    assert jnp.allclose(scale, scale_ref, atol=1e-4, rtol=1e-4), "scale mismatch"

    # torch.distributions.Normal(mu, var) -> returned here as (loc=mu, scale=var).
    print("KERNEL_OK")
</pallas_src>

<mosaic_0001>
module attributes {stable_mosaic.version = 11 : i64} {
  func.func @_convdist_kernel(%arg0: i32, %arg1: memref<8x256xf32, #tpu.memory_space<vmem>>, %arg2: memref<8x9xf32, #tpu.memory_space<vmem>>, %arg3: memref<8x1xf32, #tpu.memory_space<vmem>>, %arg4: memref<8x7xf32, #tpu.memory_space<vmem>>, %arg5: memref<8x1xf32, #tpu.memory_space<vmem>>, %arg6: memref<8x7xf32, #tpu.memory_space<vmem>>, %arg7: memref<8x1xf32, #tpu.memory_space<vmem>>, %arg8: memref<8x256xf32, #tpu.memory_space<vmem>>, %arg9: memref<8x256xf32, #tpu.memory_space<vmem>>) attributes {dimension_semantics = [#tpu.dimension_semantics<parallel>], iteration_bounds = array<i64: 2>, scalar_prefetch = 0 : i64, scratch_operands = 0 : i64, tpu.core_type = #tpu.core_type<tc>, window_params = [{transform_indices = @transform_0, window_bounds = array<i64: 8, 256>}, {transform_indices = @transform_1, window_bounds = array<i64: 8, 9>}, {transform_indices = @transform_2, window_bounds = array<i64: 8, 1>}, {transform_indices = @transform_3, window_bounds = array<i64: 8, 7>}, {transform_indices = @transform_4, window_bounds = array<i64: 8, 1>}, {transform_indices = @transform_5, window_bounds = array<i64: 8, 7>}, {transform_indices = @transform_6, window_bounds = array<i64: 8, 1>}, {transform_indices = @transform_7, window_bounds = array<i64: 8, 256>}, {transform_indices = @transform_8, window_bounds = array<i64: 8, 256>}]} {
    %c0 = arith.constant 0 : index
    %c0_0 = arith.constant 0 : index
    %0 = vector.load %arg1[%c0, %c0_0] : memref<8x256xf32, #tpu.memory_space<vmem>>, vector<8x256xf32>
    %1 = tpu.iota {dimensions = array<i32: 1>} : vector<1x256xi32>
    %c16_i32 = arith.constant 16 : i32
    %c0_i32 = arith.constant 0 : i32
    %2 = arith.cmpi eq, %c16_i32, %c0_i32 : i32
    %c1_i32 = arith.constant 1 : i32
    %3 = arith.select %2, %c1_i32, %c16_i32 : i32
    %4 = vector.broadcast %3 : i32 to vector<1x256xi32>
    %5 = arith.remsi %1, %4 : vector<1x256xi32>
    %c0_i32_1 = arith.constant 0 : i32
    %6 = vector.broadcast %c0_i32_1 : i32 to vector<1x256xi32>
    %7 = arith.cmpi ne, %5, %6 : vector<1x256xi32>
    %c0_i32_2 = arith.constant 0 : i32
    %8 = vector.broadcast %c0_i32_2 : i32 to vector<1x256xi32>
    %9 = arith.cmpi slt, %5, %8 : vector<1x256xi32>
    %c0_i32_3 = arith.constant 0 : i32
    %10 = arith.cmpi slt, %3, %c0_i32_3 : i32
    %11 = vector.broadcast %10 : i1 to vector<1x256xi1>
    %12 = vector.broadcast %11 : vector<1x256xi1> to vector<1x256xi1>
    %13 = arith.xori %9, %12 : vector<1x256xi1>
    %14 = arith.andi %13, %7 : vector<1x256xi1>
    %15 = vector.broadcast %3 : i32 to vector<1x256xi32>
    %16 = arith.addi %5, %15 : vector<1x256xi32>
    %17 = arith.select %14, %16, %5 : vector<1x256xi1>, vector<1x256xi32>
    %c0_i32_4 = arith.constant 0 : i32
    %18 = vector.broadcast %c0_i32_4 : i32 to vector<1x256xi32>
    %19 = arith.cmpi eq, %17, %18 : vector<1x256xi32>
    %c15_i32 = arith.constant 15 : i32
    %20 = vector.broadcast %c15_i32 : i32 to vector<1x256xi32>
    %21 = arith.cmpi eq, %17, %20 : vector<1x256xi32>
    %c16_i32_5 = arith.constant 16 : i32
    %22 = vector.broadcast %c16_i32_5 : i32 to vector<1x256xi32>
    %23 = arith.cmpi slt, %1, %22 : vector<1x256xi32>
    %c240_i32 = arith.constant 240 : i32
    %24 = vector.broadcast %c240_i32 : i32 to vector<1x256xi32>
    %25 = arith.cmpi sge, %1, %24 : vector<1x256xi32>
    %c17_i32 = arith.constant 17 : i32
    %26 = tpu.dynamic_rotate %0 by %c17_i32 dim 1 : vector<8x256xf32>, i32 -> vector<8x256xf32>
    %c16_i32_6 = arith.constant 16 : i32
    %27 = tpu.dynamic_rotate %0 by %c16_i32_6 dim 1 : vector<8x256xf32>, i32 -> vector<8x256xf32>
    %c15_i32_7 = arith.constant 15 : i32
    %28 = tpu.dynamic_rotate %0 by %c15_i32_7 dim 1 : vector<8x256xf32>, i32 -> vector<8x256xf32>
    %c1_i32_8 = arith.constant 1 : i32
    %29 = tpu.dynamic_rotate %0 by %c1_i32_8 dim 1 : vector<8x256xf32>, i32 -> vector<8x256xf32>
    %c255_i32 = arith.constant 255 : i32
    %30 = tpu.dynamic_rotate %0 by %c255_i32 dim 1 : vector<8x256xf32>, i32 -> vector<8x256xf32>
    %c241_i32 = arith.constant 241 : i32
    %31 = tpu.dynamic_rotate %0 by %c241_i32 dim 1 : vector<8x256xf32>, i32 -> vector<8x256xf32>
    %c240_i32_9 = arith.constant 240 : i32
    %32 = tpu.dynamic_rotate %0 by %c240_i32_9 dim 1 : vector<8x256xf32>, i32 -> vector<8x256xf32>
    %c239_i32 = arith.constant 239 : i32
    %33 = tpu.dynamic_rotate %0 by %c239_i32 dim 1 : vector<8x256xf32>, i32 -> vector<8x256xf32>
    %34 = vector.shape_cast %19 : vector<1x256xi1> to vector<1x256xi1>
    %35 = vector.broadcast %34 : vector<1x256xi1> to vector<8x256xi1>
    %36 = arith.select %35, %28, %26 : vector<8x256xi1>, vector<8x256xf32>
    %37 = vector.shape_cast %21 : vector<1x256xi1> to vector<1x256xi1>
    %38 = vector.broadcast %37 : vector<1x256xi1> to vector<8x256xi1>
    %39 = arith.select %38, %26, %28 : vector<8x256xi1>, vector<8x256xf32>
    %40 = vector.shape_cast %19 : vector<1x256xi1> to vector<1x256xi1>
    %41 = vector.broadcast %40 : vector<1x256xi1> to vector<8x256xi1>
    %42 = arith.select %41, %30, %29 : vector<8x256xi1>, vector<8x256xf32>
    %43 = vector.shape_cast %21 : vector<1x256xi1> to vector<1x256xi1>
    %44 = vector.broadcast %43 : vector<1x256xi1> to vector<8x256xi1>
    %45 = arith.select %44, %29, %30 : vector<8x256xi1>, vector<8x256xf32>
    %46 = vector.shape_cast %19 : vector<1x256xi1> to vector<1x256xi1>
    %47 = vector.broadcast %46 : vector<1x256xi1> to vector<8x256xi1>
    %48 = arith.select %47, %33, %31 : vector<8x256xi1>, vector<8x256xf32>
    %49 = vector.shape_cast %21 : vector<1x256xi1> to vector<1x256xi1>
    %50 = vector.broadcast %49 : vector<1x256xi1> to vector<8x256xi1>
    %51 = arith.select %50, %31, %33 : vector<8x256xi1>, vector<8x256xf32>
    %52 = vector.shape_cast %23 : vector<1x256xi1> to vector<1x256xi1>
    %53 = vector.broadcast %52 : vector<1x256xi1> to vector<8x256xi1>
    %54 = arith.select %53, %48, %36 : vector<8x256xi1>, vector<8x256xf32>
    %55 = vector.shape_cast %25 : vector<1x256xi1> to vector<1x256xi1>
    %56 = vector.broadcast %55 : vector<1x256xi1> to vector<8x256xi1>
    %57 = arith.select %56, %36, %48 : vector<8x256xi1>, vector<8x256xf32>
    %58 = vector.shape_cast %23 : vector<1x256xi1> to vector<1x256xi1>
    %59 = vector.broadcast %58 : vector<1x256xi1> to vector<8x256xi1>
    %60 = arith.select %59, %32, %27 : vector<8x256xi1>, vector<8x256xf32>
    %61 = vector.shape_cast %25 : vector<1x256xi1> to vector<1x256xi1>
    %62 = vector.broadcast %61 : vector<1x256xi1> to vector<8x256xi1>
    %63 = arith.select %62, %27, %32 : vector<8x256xi1>, vector<8x256xf32>
    %64 = vector.shape_cast %23 : vector<1x256xi1> to vector<1x256xi1>
    %65 = vector.broadcast %64 : vector<1x256xi1> to vector<8x256xi1>
    %66 = arith.select %65, %51, %39 : vector<8x256xi1>, vector<8x256xf32>
    %67 = vector.shape_cast %25 : vector<1x256xi1> to vector<1x256xi1>
    %68 = vector.broadcast %67 : vector<1x256xi1> to vector<8x256xi1>
    %69 = arith.select %68, %39, %51 : vector<8x256xi1>, vector<8x256xf32>
    %c0_10 = arith.constant 0 : index
    %c0_11 = arith.constant 0 : index
    %70 = vector.load %arg2[%c0_10, %c0_11] : memref<8x9xf32, #tpu.memory_space<vmem>>, vector<8x1xf32>
    %71 = vector.broadcast %70 : vector<8x1xf32> to vector<8x256xf32>
    %72 = arith.mulf %54, %71 : vector<8x256xf32>
    %c0_12 = arith.constant 0 : index
    %c1 = arith.constant 1 : index
    %73 = vector.load %arg2[%c0_12, %c1] : memref<8x9xf32, #tpu.memory_space<vmem>>, vector<8x1xf32>
    %74 = vector.broadcast %73 : vector<8x1xf32> to vector<8x256xf32>
    %75 = arith.mulf %60, %74 : vector<8x256xf32>
    %76 = arith.addf %72, %75 : vector<8x256xf32>
    %c0_13 = arith.constant 0 : index
    %c2 = arith.constant 2 : index
    %77 = vector.load %arg2[%c0_13, %c2] : memref<8x9xf32, #tpu.memory_space<vmem>>, vector<8x1xf32>
    %78 = vector.broadcast %77 : vector<8x1xf32> to vector<8x256xf32>
    %79 = arith.mulf %66, %78 : vector<8x256xf32>
    %80 = arith.addf %76, %79 : vector<8x256xf32>
    %c0_14 = arith.constant 0 : index
    %c3 = arith.constant 3 : index
    %81 = vector.load %arg2[%c0_14, %c3] : memref<8x9xf32, #tpu.memory_space<vmem>>, vector<8x1xf32>
    %82 = vector.broadcast %81 : vector<8x1xf32> to vector<8x256xf32>
    %83 = arith.mulf %42, %82 : vector<8x256xf32>
    %84 = arith.addf %80, %83 : vector<8x256xf32>
    %c0_15 = arith.constant 0 : index
    %c4 = arith.constant 4 : index
    %85 = vector.load %arg2[%c0_15, %c4] : memref<8x9xf32, #tpu.memory_space<vmem>>, vector<8x1xf32>
    %86 = vector.broadcast %85 : vector<8x1xf32> to vector<8x256xf32>
    %87 = arith.mulf %0, %86 : vector<8x256xf32>
    %88 = arith.addf %84, %87 : vector<8x256xf32>
    %c0_16 = arith.constant 0 : index
    %c5 = arith.constant 5 : index
    %89 = vector.load %arg2[%c0_16, %c5] : memref<8x9xf32, #tpu.memory_space<vmem>>, vector<8x1xf32>
    %90 = vector.broadcast %89 : vector<8x1xf32> to vector<8x256xf32>
    %91 = arith.mulf %45, %90 : vector<8x256xf32>
    %92 = arith.addf %88, %91 : vector<8x256xf32>
    %c0_17 = arith.constant 0 : index
    %c6 = arith.constant 6 : index
    %93 = vector.load %arg2[%c0_17, %c6] : memref<8x9xf32, #tpu.memory_space<vmem>>, vector<8x1xf32>
    %94 = vector.broadcast %93 : vector<8x1xf32> to vector<8x256xf32>
    %95 = arith.mulf %57, %94 : vector<8x256xf32>
    %96 = arith.addf %92, %95 : vector<8x256xf32>
    %c0_18 = arith.constant 0 : index
    %c7 = arith.constant 7 : index
    %97 = vector.load %arg2[%c0_18, %c7] : memref<8x9xf32, #tpu.memory_space<vmem>>, vector<8x1xf32>
    %98 = vector.broadcast %97 : vector<8x1xf32> to vector<8x256xf32>
    %99 = arith.mulf %63, %98 : vector<8x256xf32>
    %100 = arith.addf %96, %99 : vector<8x256xf32>
    %c0_19 = arith.constant 0 : index
    %c8 = arith.constant 8 : index
    %101 = vector.load %arg2[%c0_19, %c8] : memref<8x9xf32, #tpu.memory_space<vmem>>, vector<8x1xf32>
    %102 = vector.broadcast %101 : vector<8x1xf32> to vector<8x256xf32>
    %103 = arith.mulf %69, %102 : vector<8x256xf32>
    %104 = arith.addf %100, %103 : vector<8x256xf32>
    %c0_20 = arith.constant 0 : index
    %c0_21 = arith.constant 0 : index
    %105 = vector.load %arg3[%c0_20, %c0_21] : memref<8x1xf32, #tpu.memory_space<vmem>>, vector<8x1xf32>
    %106 = vector.broadcast %105 : vector<8x1xf32> to vector<8x256xf32>
    %107 = arith.addf %104, %106 : vector<8x256xf32>
    %c3_i32 = arith.constant 3 : i32
    %108 = tpu.dynamic_rotate %107 by %c3_i32 dim 0 : vector<8x256xf32>, i32 -> vector<8x256xf32>
    %c0_22 = arith.constant 0 : index
    %c0_23 = arith.constant 0 : index
    %109 = vector.load %arg4[%c0_22, %c0_23] : memref<8x7xf32, #tpu.memory_space<vmem>>, vector<8x1xf32>
    %110 = vector.broadcast %109 : vector<8x1xf32> to vector<8x256xf32>
    %111 = arith.mulf %108, %110 : vector<8x256xf32>
    %c0_24 = arith.constant 0 : index
    %c0_25 = arith.constant 0 : index
    %112 = vector.load %arg6[%c0_24, %c0_25] : memref<8x7xf32, #tpu.memory_space<vmem>>, vector<8x1xf32>
    %113 = vector.broadcast %112 : vector<8x1xf32> to vector<8x256xf32>
    %114 = arith.mulf %108, %113 : vector<8x256xf32>
    %c2_i32 = arith.constant 2 : i32
    %115 = tpu.dynamic_rotate %107 by %c2_i32 dim 0 : vector<8x256xf32>, i32 -> vector<8x256xf32>
    %c0_26 = arith.constant 0 : index
    %c1_27 = arith.constant 1 : index
    %116 = vector.load %arg4[%c0_26, %c1_27] : memref<8x7xf32, #tpu.memory_space<vmem>>, vector<8x1xf32>
    %117 = vector.broadcast %116 : vector<8x1xf32> to vector<8x256xf32>
    %118 = arith.mulf %115, %117 : vector<8x256xf32>
    %c0_28 = arith.constant 0 : index
    %c1_29 = arith.constant 1 : index
    %119 = vector.load %arg6[%c0_28, %c1_29] : memref<8x7xf32, #tpu.memory_space<vmem>>, vector<8x1xf32>
    %120 = vector.broadcast %119 : vector<8x1xf32> to vector<8x256xf32>
    %121 = arith.mulf %115, %120 : vector<8x256xf32>
    %122 = arith.addf %111, %118 : vector<8x256xf32>
    %123 = arith.addf %114, %121 : vector<8x256xf32>
    %c1_i32_30 = arith.constant 1 : i32
    %124 = tpu.dynamic_rotate %107 by %c1_i32_30 dim 0 : vector<8x256xf32>, i32 -> vector<8x256xf32>
    %c0_31 = arith.constant 0 : index
    %c2_32 = arith.constant 2 : index
    %125 = vector.load %arg4[%c0_31, %c2_32] : memref<8x7xf32, #tpu.memory_space<vmem>>, vector<8x1xf32>
    %126 = vector.broadcast %125 : vector<8x1xf32> to vector<8x256xf32>
    %127 = arith.mulf %124, %126 : vector<8x256xf32>
    %c0_33 = arith.constant 0 : index
    %c2_34 = arith.constant 2 : index
    %128 = vector.load %arg6[%c0_33, %c2_34] : memref<8x7xf32, #tpu.memory_space<vmem>>, vector<8x1xf32>
    %129 = vector.broadcast %128 : vector<8x1xf32> to vector<8x256xf32>
    %130 = arith.mulf %124, %129 : vector<8x256xf32>
    %131 = arith.addf %122, %127 : vector<8x256xf32>
    %132 = arith.addf %123, %130 : vector<8x256xf32>
    %c0_35 = arith.constant 0 : index
    %c3_36 = arith.constant 3 : index
    %133 = vector.load %arg4[%c0_35, %c3_36] : memref<8x7xf32, #tpu.memory_space<vmem>>, vector<8x1xf32>
    %134 = vector.broadcast %133 : vector<8x1xf32> to vector<8x256xf32>
    %135 = arith.mulf %107, %134 : vector<8x256xf32>
    %c0_37 = arith.constant 0 : index
    %c3_38 = arith.constant 3 : index
    %136 = vector.load %arg6[%c0_37, %c3_38] : memref<8x7xf32, #tpu.memory_space<vmem>>, vector<8x1xf32>
    %137 = vector.broadcast %136 : vector<8x1xf32> to vector<8x256xf32>
    %138 = arith.mulf %107, %137 : vector<8x256xf32>
    %139 = arith.addf %131, %135 : vector<8x256xf32>
    %140 = arith.addf %132, %138 : vector<8x256xf32>
    %c7_i32 = arith.constant 7 : i32
    %141 = tpu.dynamic_rotate %107 by %c7_i32 dim 0 : vector<8x256xf32>, i32 -> vector<8x256xf32>
    %c0_39 = arith.constant 0 : index
    %c4_40 = arith.constant 4 : index
    %142 = vector.load %arg4[%c0_39, %c4_40] : memref<8x7xf32, #tpu.memory_space<vmem>>, vector<8x1xf32>
    %143 = vector.broadcast %142 : vector<8x1xf32> to vector<8x256xf32>
    %144 = arith.mulf %141, %143 : vector<8x256xf32>
    %c0_41 = arith.constant 0 : index
    %c4_42 = arith.constant 4 : index
    %145 = vector.load %arg6[%c0_41, %c4_42] : memref<8x7xf32, #tpu.memory_space<vmem>>, vector<8x1xf32>
    %146 = vector.broadcast %145 : vector<8x1xf32> to vector<8x256xf32>
    %147 = arith.mulf %141, %146 : vector<8x256xf32>
    %148 = arith.addf %139, %144 : vector<8x256xf32>
    %149 = arith.addf %140, %147 : vector<8x256xf32>
    %c6_i32 = arith.constant 6 : i32
    %150 = tpu.dynamic_rotate %107 by %c6_i32 dim 0 : vector<8x256xf32>, i32 -> vector<8x256xf32>
    %c0_43 = arith.constant 0 : index
    %c5_44 = arith.constant 5 : index
    %151 = vector.load %arg4[%c0_43, %c5_44] : memref<8x7xf32, #tpu.memory_space<vmem>>, vector<8x1xf32>
    %152 = vector.broadcast %151 : vector<8x1xf32> to vector<8x256xf32>
    %153 = arith.mulf %150, %152 : vector<8x256xf32>
    %c0_45 = arith.constant 0 : index
    %c5_46 = arith.constant 5 : index
    %154 = vector.load %arg6[%c0_45, %c5_46] : memref<8x7xf32, #tpu.memory_space<vmem>>, vector<8x1xf32>
    %155 = vector.broadcast %154 : vector<8x1xf32> to vector<8x256xf32>
    %156 = arith.mulf %150, %155 : vector<8x256xf32>
    %157 = arith.addf %148, %153 : vector<8x256xf32>
    %158 = arith.addf %149, %156 : vector<8x256xf32>
    %c5_i32 = arith.constant 5 : i32
    %159 = tpu.dynamic_rotate %107 by %c5_i32 dim 0 : vector<8x256xf32>, i32 -> vector<8x256xf32>
    %c0_47 = arith.constant 0 : index
    %c6_48 = arith.constant 6 : index
    %160 = vector.load %arg4[%c0_47, %c6_48] : memref<8x7xf32, #tpu.memory_space<vmem>>, vector<8x1xf32>
    %161 = vector.broadcast %160 : vector<8x1xf32> to vector<8x256xf32>
    %162 = arith.mulf %159, %161 : vector<8x256xf32>
    %c0_49 = arith.constant 0 : index
    %c6_50 = arith.constant 6 : index
    %163 = vector.load %arg6[%c0_49, %c6_50] : memref<8x7xf32, #tpu.memory_space<vmem>>, vector<8x1xf32>
    %164 = vector.broadcast %163 : vector<8x1xf32> to vector<8x256xf32>
    %165 = arith.mulf %159, %164 : vector<8x256xf32>
    %166 = arith.addf %157, %162 : vector<8x256xf32>
    %167 = arith.addf %158, %165 : vector<8x256xf32>
    %c0_51 = arith.constant 0 : index
    %c0_52 = arith.constant 0 : index
    %168 = vector.load %arg5[%c0_51, %c0_52] : memref<8x1xf32, #tpu.memory_space<vmem>>, vector<8x1xf32>
    %169 = vector.broadcast %168 : vector<8x1xf32> to vector<8x256xf32>
    %170 = arith.addf %166, %169 : vector<8x256xf32>
    %c0_53 = arith.constant 0 : index
    %c0_54 = arith.constant 0 : index
    %171 = vector.load %arg7[%c0_53, %c0_54] : memref<8x1xf32, #tpu.memory_space<vmem>>, vector<8x1xf32>
    %172 = vector.broadcast %171 : vector<8x1xf32> to vector<8x256xf32>
    %173 = arith.addf %167, %172 : vector<8x256xf32>
    %174 = math.tanh %173 : vector<8x256xf32>
    %cst = arith.constant 1.000000e+00 : f32
    %175 = vector.broadcast %cst : f32 to vector<8x256xf32>
    %176 = arith.addf %174, %175 : vector<8x256xf32>
    %cst_55 = arith.constant 6.000000e+00 : f32
    %177 = vector.broadcast %cst_55 : f32 to vector<8x256xf32>
    %178 = arith.mulf %177, %176 : vector<8x256xf32>
    %cst_56 = arith.constant -1.000000e+01 : f32
    %179 = vector.broadcast %cst_56 : f32 to vector<8x256xf32>
    %180 = arith.addf %179, %178 : vector<8x256xf32>
    %c0_57 = arith.constant 0 : index
    %c0_58 = arith.constant 0 : index
    %181 = vector.load %arg8[%c0_57, %c0_58] : memref<8x256xf32, #tpu.memory_space<vmem>>, vector<8x256xf32>
    tpu.vector_store %arg8[%c0_57, %c0_58], %170 {strides = array<i32>} : memref<8x256xf32, #tpu.memory_space<vmem>>, vector<8x256xf32>,
    %182 = math.exp %180 : vector<8x256xf32>
    %c0_59 = arith.constant 0 : index
    %c0_60 = arith.constant 0 : index
    %183 = vector.load %arg9[%c0_59, %c0_60] : memref<8x256xf32, #tpu.memory_space<vmem>>, vector<8x256xf32>
    tpu.vector_store %arg9[%c0_59, %c0_60], %182 {strides = array<i32>} : memref<8x256xf32, #tpu.memory_space<vmem>>, vector<8x256xf32>,
    return
  }
  func.func @transform_0(%arg0: i32) -> (i32, i32) {
    %c0_i32 = arith.constant 0 : i32
    %c0_i32_0 = arith.constant 0 : i32
    return %arg0, %c0_i32 : i32, i32
  }
  func.func @transform_1(%arg0: i32) -> (i32, i32) {
    %c0_i32 = arith.constant 0 : i32
    %c0_i32_0 = arith.constant 0 : i32
    return %arg0, %c0_i32 : i32, i32
  }
  func.func @transform_2(%arg0: i32) -> (i32, i32) {
    %c0_i32 = arith.constant 0 : i32
    %c0_i32_0 = arith.constant 0 : i32
    return %arg0, %c0_i32 : i32, i32
  }
  func.func @transform_3(%arg0: i32) -> (i32, i32) {
    %c0_i32 = arith.constant 0 : i32
    %c0_i32_0 = arith.constant 0 : i32
    return %arg0, %c0_i32 : i32, i32
  }
  func.func @transform_4(%arg0: i32) -> (i32, i32) {
    %c0_i32 = arith.constant 0 : i32
    %c0_i32_0 = arith.constant 0 : i32
    return %arg0, %c0_i32 : i32, i32
  }
  func.func @transform_5(%arg0: i32) -> (i32, i32) {
    %c0_i32 = arith.constant 0 : i32
    %c0_i32_0 = arith.constant 0 : i32
    return %arg0, %c0_i32 : i32, i32
  }
  func.func @transform_6(%arg0: i32) -> (i32, i32) {
    %c0_i32 = arith.constant 0 : i32
    %c0_i32_0 = arith.constant 0 : i32
    return %arg0, %c0_i32 : i32, i32
  }
  func.func @transform_7(%arg0: i32) -> (i32, i32) {
    %c0_i32 = arith.constant 0 : i32
    %c0_i32_0 = arith.constant 0 : i32
    return %arg0, %c0_i32 : i32, i32
  }
  func.func @transform_8(%arg0: i32) -> (i32, i32) {
    %c0_i32 = arith.constant 0 : i32
    %c0_i32_0 = arith.constant 0 : i32
    return %arg0, %c0_i32 : i32, i32
  }
}

</mosaic_0001>

<llo_original>
// kernel: tpu_custom_call.1
$region0: #{tpu_custom_call.1}
  #allocation0 [shape = 'u32[]', space=smem, size = 0x4, offset = 0x4, fixed_abs, tag = 'smem constant byte address 0x4 - core index']
  #allocation1 [shape = 'u32[144,128]{1,0:T(1,128)}', space=vmem, size = 0x12000, scoped, tag = 'internal scratch']
  %s0 = inlined_call_operand.vmem [shape: f32[16,256], index: 0, kind: input, shape index: {}]
  %s1 = inlined_call_operand.vmem [shape: f32[16,9], index: 1, kind: input, shape index: {}]
  %s2 = inlined_call_operand.vmem [shape: f32[16,1], index: 2, kind: input, shape index: {}]
  %s3 = inlined_call_operand.vmem [shape: f32[16,7], index: 3, kind: input, shape index: {}]
  %s4 = inlined_call_operand.vmem [shape: f32[16,1], index: 4, kind: input, shape index: {}]
  %s5 = inlined_call_operand.vmem [shape: f32[16,7], index: 5, kind: input, shape index: {}]
  %s6 = inlined_call_operand.vmem [shape: f32[16,1], index: 6, kind: input, shape index: {}]
  %s7 = inlined_call_operand.hbm [shape: f32[16,256], index: 7, kind: output, shape index: {0}]
  %s8 = inlined_call_operand.hbm [shape: f32[16,256], index: 8, kind: output, shape index: {1}]
  %9 = xla_tuple %s7, %s8
  %s10 = sld [smem:[#allocation0]]
  $region69: #{tpu_custom_call.1} parent=0
    _
  %s12 = ssub.s32 1, %s10
  %s13 = scalar_select 0, %s12, %s10
  $region1: #{tpu_custom_call.1} parent=0
    #allocation2 [shape = 'u8[16384]{0}', space=vmem, size = 0x4000, scoped, tag = 'output window, operand 0']
    #allocation3 [shape = 's32[2]{0}', space=sflag, size = 0x8, scoped, tag = 'scoped memory for tpu_custom_call.1']
    #allocation4 [shape = 'u8[16384]{0}', space=vmem, size = 0x4000, scoped, tag = 'output window, operand 1']
    #allocation5 [shape = 's32[2]{0}', space=sflag, size = 0x8, scoped, tag = 'scoped memory for tpu_custom_call.1']
    %14 = vsyncpa [#allocation3], 0
    %s15 = scalar_lea.sflag [#allocation3], 1
    %16 = vsyncpa %s15, 0
    %17 = vsyncpa [#allocation5], 0
    %s18 = scalar_lea.sflag [#allocation5], 1
    %19 = vsyncpa %s18, 0
    loop: start=0, step=1, limit=4
    $region2: #{tpu_custom_call.1} parent=1 // loop_pre_header
      _
    $region3: #{tpu_custom_call.1} parent=1 // loop_header
      %s21 = sphi 0, %s25
      %p22 = scmp.ge.s32.totalorder %s21, 4
      %s31 = sphi 0, %s33
      %s34 = sphi 0, %s31
      %s35 = sphi 0, %s34
      %s51 = sphi 0, %s35
      %s57 = sphi 0, %s59
      %s60 = sphi 0, %s57
      %s61 = sphi 0, %s60
      %s77 = sphi 0, %s61
      %s83 = sphi 0, %s85
      %s86 = sphi 0, %s83
      %s87 = sphi 0, %s86
      %s103 = sphi 0, %s87
      %s109 = sphi 0, %s111
      %s112 = sphi 0, %s109
      %s113 = sphi 0, %s112
      %s129 = sphi 0, %s113
      %s135 = sphi 0, %s137
      %s138 = sphi 0, %s135
      %s139 = sphi 0, %s138
      %s155 = sphi 0, %s139
      %s161 = sphi 0, %s163
      %s164 = sphi 0, %s161
      %s165 = sphi 0, %s164
      %s181 = sphi 0, %s165
      %s187 = sphi 0, %s189
      %s190 = sphi 0, %s187
      %s191 = sphi 0, %s190
      %s207 = sphi 0, %s191
      %s213 = sphi 0, %s215
      %s216 = sphi 0, %s213
      %s217 = sphi 0, %s216
      %s233 = sphi 0, %s217
      %s239 = sphi 0, %s241
      %s242 = sphi 0, %s239
      %s243 = sphi 0, %s242
      %s259 = sphi 0, %s243
    $region4: #{tpu_custom_call.1} parent=1 // loop_header_branch
      %24 = sbr.rel (%p22) target = $region8
    $region5: #{tpu_custom_call.1} parent=1 // loop_body
      %s26 = ssub.s32 %s21, 1
      %s27 = ssub.s32 %s21, 2
      %s28 = sadd.s32 %s21, 1
      %s29 = ssub.s32 %s21, %s28
      %p30 = scmp.eq.s32.totalorder %s29, 0
      %s32 = sadd.s32 %s31, 1
      %s33 = scalar_select %p30, %s31, %s32
      %p36 = pneg %p30
      %p37 = scmp.eq.s32.totalorder %s21, 1
      %p38 = por %p36, %p37
      %p39 = scmp.ne.s32.totalorder %s31, %s34
      %p40 = scmp.eq.s32.totalorder %s21, 0
      %p41 = por %p39, %p40
      %p42 = scmp.ne.s32.totalorder %s31, %s34
      %p43 = scmp.eq.s32.totalorder %s26, 1
      %p44 = por %p42, %p43
      %p45 = scmp.ne.s32.totalorder %s34, %s35
      %p46 = scmp.eq.s32.totalorder %s26, 0
      %p47 = por %p45, %p46
      %p48 = scmp.ne.s32.totalorder %s34, %s35
      %p49 = scmp.eq.s32.totalorder %s27, 1
      %p50 = por %p48, %p49
      %p52 = scmp.ne.s32.totalorder %s35, %s51
      %p53 = scmp.eq.s32.totalorder %s27, 0
      %p54 = por %p52, %p53
      %s55 = ssub.s32 %s21, %s28
      %p56 = scmp.eq.s32.totalorder %s55, 0
      %s58 = sadd.s32 %s57, 1
      %s59 = scalar_select %p56, %s57, %s58
      %p62 = pneg %p56
      %p63 = scmp.eq.s32.totalorder %s21, 1
      %p64 = por %p62, %p63
      %p65 = scmp.ne.s32.totalorder %s57, %s60
      %p66 = scmp.eq.s32.totalorder %s21, 0
      %p67 = por %p65, %p66
      %p68 = scmp.ne.s32.totalorder %s57, %s60
      %p69 = scmp.eq.s32.totalorder %s26, 1
      %p70 = por %p68, %p69
      %p71 = scmp.ne.s32.totalorder %s60, %s61
      %p72 = scmp.eq.s32.totalorder %s26, 0
      %p73 = por %p71, %p72
      %p74 = scmp.ne.s32.totalorder %s60, %s61
      %p75 = scmp.eq.s32.totalorder %s27, 1
      %p76 = por %p74, %p75
      %p78 = scmp.ne.s32.totalorder %s61, %s77
      %p79 = scmp.eq.s32.totalorder %s27, 0
      %p80 = por %p78, %p79
      %s81 = ssub.s32 %s21, %s28
      %p82 = scmp.eq.s32.totalorder %s81, 0
      %s84 = sadd.s32 %s83, 1
      %s85 = scalar_select %p82, %s83, %s84
      %p88 = pneg %p82
      %p89 = scmp.eq.s32.totalorder %s21, 1
      %p90 = por %p88, %p89
      %p91 = scmp.ne.s32.totalorder %s83, %s86
      %p92 = scmp.eq.s32.totalorder %s21, 0
      %p93 = por %p91, %p92
      %p94 = scmp.ne.s32.totalorder %s83, %s86
      %p95 = scmp.eq.s32.totalorder %s26, 1
      %p96 = por %p94, %p95
      %p97 = scmp.ne.s32.totalorder %s86, %s87
      %p98 = scmp.eq.s32.totalorder %s26, 0
      %p99 = por %p97, %p98
      %p100 = scmp.ne.s32.totalorder %s86, %s87
      %p101 = scmp.eq.s32.totalorder %s27, 1
      %p102 = por %p100, %p101
      %p104 = scmp.ne.s32.totalorder %s87, %s103
      %p105 = scmp.eq.s32.totalorder %s27, 0
      %p106 = por %p104, %p105
      %s107 = ssub.s32 %s21, %s28
      %p108 = scmp.eq.s32.totalorder %s107, 0
      %s110 = sadd.s32 %s109, 1
      %s111 = scalar_select %p108, %s109, %s110
      %p114 = pneg %p108
      %p115 = scmp.eq.s32.totalorder %s21, 1
      %p116 = por %p114, %p115
      %p117 = scmp.ne.s32.totalorder %s109, %s112
      %p118 = scmp.eq.s32.totalorder %s21, 0
      %p119 = por %p117, %p118
      %p120 = scmp.ne.s32.totalorder %s109, %s112
      %p121 = scmp.eq.s32.totalorder %s26, 1
      %p122 = por %p120, %p121
      %p123 = scmp.ne.s32.totalorder %s112, %s113
      %p124 = scmp.eq.s32.totalorder %s26, 0
      %p125 = por %p123, %p124
      %p126 = scmp.ne.s32.totalorder %s112, %s113
      %p127 = scmp.eq.s32.totalorder %s27, 1
      %p128 = por %p126, %p127
      %p130 = scmp.ne.s32.totalorder %s113, %s129
      %p131 = scmp.eq.s32.totalorder %s27, 0
      %p132 = por %p130, %p131
      %s133 = ssub.s32 %s21, %s28
      %p134 = scmp.eq.s32.totalorder %s133, 0
      %s136 = sadd.s32 %s135, 1
      %s137 = scalar_select %p134, %s135, %s136
      %p140 = pneg %p134
      %p141 = scmp.eq.s32.totalorder %s21, 1
      %p142 = por %p140, %p141
      %p143 = scmp.ne.s32.totalorder %s135, %s138
      %p144 = scmp.eq.s32.totalorder %s21, 0
      %p145 = por %p143, %p144
      %p146 = scmp.ne.s32.totalorder %s135, %s138
      %p147 = scmp.eq.s32.totalorder %s26, 1
      %p148 = por %p146, %p147
      %p149 = scmp.ne.s32.totalorder %s138, %s139
      %p150 = scmp.eq.s32.totalorder %s26, 0
      %p151 = por %p149, %p150
      %p152 = scmp.ne.s32.totalorder %s138, %s139
      %p153 = scmp.eq.s32.totalorder %s27, 1
      %p154 = por %p152, %p153
      %p156 = scmp.ne.s32.totalorder %s139, %s155
      %p157 = scmp.eq.s32.totalorder %s27, 0
      %p158 = por %p156, %p157
      %s159 = ssub.s32 %s21, %s28
      %p160 = scmp.eq.s32.totalorder %s159, 0
      %s162 = sadd.s32 %s161, 1
      %s163 = scalar_select %p160, %s161, %s162
      %p166 = pneg %p160
      %p167 = scmp.eq.s32.totalorder %s21, 1
      %p168 = por %p166, %p167
      %p169 = scmp.ne.s32.totalorder %s161, %s164
      %p170 = scmp.eq.s32.totalorder %s21, 0
      %p171 = por %p169, %p170
      %p172 = scmp.ne.s32.totalorder %s161, %s164
      %p173 = scmp.eq.s32.totalorder %s26, 1
      %p174 = por %p172, %p173
      %p175 = scmp.ne.s32.totalorder %s164, %s165
      %p176 = scmp.eq.s32.totalorder %s26, 0
      %p177 = por %p175, %p176
      %p178 = scmp.ne.s32.totalorder %s164, %s165
      %p179 = scmp.eq.s32.totalorder %s27, 1
      %p180 = por %p178, %p179
      %p182 = scmp.ne.s32.totalorder %s165, %s181
      %p183 = scmp.eq.s32.totalorder %s27, 0
      %p184 = por %p182, %p183
      %s185 = ssub.s32 %s21, %s28
      %p186 = scmp.eq.s32.totalorder %s185, 0
      %s188 = sadd.s32 %s187, 1
      %s189 = scalar_select %p186, %s187, %s188
      %p192 = pneg %p186
      %p193 = scmp.eq.s32.totalorder %s21, 1
      %p194 = por %p192, %p193
      %p195 = scmp.ne.s32.totalorder %s187, %s190
      %p196 = scmp.eq.s32.totalorder %s21, 0
      %p197 = por %p195, %p196
      %p198 = scmp.ne.s32.totalorder %s187, %s190
      %p199 = scmp.eq.s32.totalorder %s26, 1
      %p200 = por %p198, %p199
      %p201 = scmp.ne.s32.totalorder %s190, %s191
      %p202 = scmp.eq.s32.totalorder %s26, 0
      %p203 = por %p201, %p202
      %p204 = scmp.ne.s32.totalorder %s190, %s191
      %p205 = scmp.eq.s32.totalorder %s27, 1
      %p206 = por %p204, %p205
      %p208 = scmp.ne.s32.totalorder %s191, %s207
      %p209 = scmp.eq.s32.totalorder %s27, 0
      %p210 = por %p208, %p209
      %s211 = ssub.s32 %s21, %s28
      %p212 = scmp.eq.s32.totalorder %s211, 0
      %s214 = sadd.s32 %s213, 1
      %s215 = scalar_select %p212, %s213, %s214
      %p218 = pneg %p212
      %p219 = scmp.eq.s32.totalorder %s21, 1
      %p220 = por %p218, %p219
      %p221 = scmp.ne.s32.totalorder %s213, %s216
      %p222 = scmp.eq.s32.totalorder %s21, 0
      %p223 = por %p221, %p222
      %p224 = scmp.ne.s32.totalorder %s213, %s216
      %p225 = scmp.eq.s32.totalorder %s26, 1
      %p226 = por %p224, %p225
      %p227 = scmp.ne.s32.totalorder %s216, %s217
      %p228 = scmp.eq.s32.totalorder %s26, 0
      %p229 = por %p227, %p228
      %p230 = scmp.ne.s32.totalorder %s216, %s217
      %p231 = scmp.eq.s32.totalorder %s27, 1
      %p232 = por %p230, %p231
      %p234 = scmp.ne.s32.totalorder %s217, %s233
      %p235 = scmp.eq.s32.totalorder %s27, 0
      %p236 = por %p234, %p235
      %s237 = ssub.s32 %s21, %s28
      %p238 = scmp.eq.s32.totalorder %s237, 0
      %s240 = sadd.s32 %s239, 1
      %s241 = scalar_select %p238, %s239, %s240
      %p244 = pneg %p238
      %p245 = scmp.eq.s32.totalorder %s21, 1
      %p246 = por %p244, %p245
      %p247 = scmp.ne.s32.totalorder %s239, %s242
      %p248 = scmp.eq.s32.totalorder %s21, 0
      %p249 = por %p247, %p248
      %p250 = scmp.ne.s32.totalorder %s239, %s242
      %p251 = scmp.eq.s32.totalorder %s26, 1
      %p252 = por %p250, %p251
      %p253 = scmp.ne.s32.totalorder %s242, %s243
      %p254 = scmp.eq.s32.totalorder %s26, 0
      %p255 = por %p253, %p254
      %p256 = scmp.ne.s32.totalorder %s242, %s243
      %p257 = scmp.eq.s32.totalorder %s27, 1
      %p258 = por %p256, %p257
      %p260 = scmp.ne.s32.totalorder %s243, %s259
      %p261 = scmp.eq.s32.totalorder %s27, 0
      %p262 = por %p260, %p261
      %p263 = scmp.le.s32.totalorder 1, %s21
      %p264 = scmp.lt.s32.totalorder %s21, 3
      %p265 = pnand %p263, %p264
      %p266 = pneg %p265
      // Predicated region
      $region9: #{tpu_custom_call.1} parent=5 // pred_check
        _
      $region10: #{tpu_custom_call.1} parent=5 // pred_check_branch
        %268 = sbr.rel (%p265) target = $region12
      $region11: #{tpu_custom_call.1} parent=5 // pred_region
        %s269 = ssub.s32 %s21, 1
      $region12: #{tpu_custom_call.1} parent=5 // pred_fallthru
        _
      %p270 = scmp.lt.s32.totalorder %s21, 2
      // Predicated region
      $region13: #{tpu_custom_call.1} parent=5 // pred_check
        %p271 = pneg %p270
      $region14: #{tpu_custom_call.1} parent=5 // pred_check_branch
        %273 = sbr.rel (%p271) target = $region16
      $region15: #{tpu_custom_call.1} parent=5 // pred_region
        // Predicated region
        $region17: #{tpu_custom_call.1} parent=15 // pred_check
          %p274 = pneg %p41
        $region18: #{tpu_custom_call.1} parent=15 // pred_check_branch
          %276 = sbr.rel (%p274) target = $region20
        $region19: #{tpu_custom_call.1} parent=15 // pred_region
          %p277 = scmp.lt.s32.totalorder %s21, 1
          %s278 = scalar_select %p277, %s21, 1
          %s279 = smul.addr %s278, 2
          %s280 = smul.addr %s279, 8
          %s281 = scalar_lea.vmem %s0, %s280
        $region20: #{tpu_custom_call.1} parent=15 // pred_fallthru
          _
        // Predicated region
        $region21: #{tpu_custom_call.1} parent=15 // pred_check
          %p282 = pneg %p67
        $region22: #{tpu_custom_call.1} parent=15 // pred_check_branch
          %284 = sbr.rel (%p282) target = $region24
        $region23: #{tpu_custom_call.1} parent=15 // pred_region
          %p285 = scmp.lt.s32.totalorder %s21, 1
          %s286 = scalar_select %p285, %s21, 1
          %s287 = smul.addr %s286, 8
          %s288 = scalar_lea.vmem %s1, %s287
        $region24: #{tpu_custom_call.1} parent=15 // pred_fallthru
          _
        // Predicated region
        $region25: #{tpu_custom_call.1} parent=15 // pred_check
          %p289 = pneg %p93
        $region26: #{tpu_custom_call.1} parent=15 // pred_check_branch
          %291 = sbr.rel (%p289) target = $region28
        $region27: #{tpu_custom_call.1} parent=15 // pred_region
          %p292 = scmp.lt.s32.totalorder %s21, 1
          %s293 = scalar_select %p292, %s21, 1
          %s294 = smul.addr %s293, 8
          %s295 = scalar_lea.vmem %s2, %s294
        $region28: #{tpu_custom_call.1} parent=15 // pred_fallthru
          _
        // Predicated region
        $region29: #{tpu_custom_call.1} parent=15 // pred_check
          %p296 = pneg %p119
        $region30: #{tpu_custom_call.1} parent=15 // pred_check_branch
          %298 = sbr.rel (%p296) target = $region32
        $region31: #{tpu_custom_call.1} parent=15 // pred_region
          %p299 = scmp.lt.s32.totalorder %s21, 1
          %s300 = scalar_select %p299, %s21, 1
          %s301 = smul.addr %s300, 8
          %s302 = scalar_lea.vmem %s3, %s301
        $region32: #{tpu_custom_call.1} parent=15 // pred_fallthru
          _
        // Predicated region
        $region33: #{tpu_custom_call.1} parent=15 // pred_check
          %p303 = pneg %p145
        $region34: #{tpu_custom_call.1} parent=15 // pred_check_branch
          %305 = sbr.rel (%p303) target = $region36
        $region35: #{tpu_custom_call.1} parent=15 // pred_region
          %p306 = scmp.lt.s32.totalorder %s21, 1
          %s307 = scalar_select %p306, %s21, 1
          %s308 = smul.addr %s307, 8
          %s309 = scalar_lea.vmem %s4, %s308
        $region36: #{tpu_custom_call.1} parent=15 // pred_fallthru
          _
        // Predicated region
        $region37: #{tpu_custom_call.1} parent=15 // pred_check
          %p310 = pneg %p171
        $region38: #{tpu_custom_call.1} parent=15 // pred_check_branch
          %312 = sbr.rel (%p310) target = $region40
        $region39: #{tpu_custom_call.1} parent=15 // pred_region
          %p313 = scmp.lt.s32.totalorder %s21, 1
          %s314 = scalar_select %p313, %s21, 1
          %s315 = smul.addr %s314, 8
          %s316 = scalar_lea.vmem %s5, %s315
        $region40: #{tpu_custom_call.1} parent=15 // pred_fallthru
          _
        // Predicated region
        $region41: #{tpu_custom_call.1} parent=15 // pred_check
          %p317 = pneg %p197
        $region42: #{tpu_custom_call.1} parent=15 // pred_check_branch
          %319 = sbr.rel (%p317) target = $region44
        $region43: #{tpu_custom_call.1} parent=15 // pred_region
          %p320 = scmp.lt.s32.totalorder %s21, 1
          %s321 = scalar_select %p320, %s21, 1
          %s322 = smul.addr %s321, 8
          %s323 = scalar_lea.vmem %s6, %s322
        $region44: #{tpu_custom_call.1} parent=15 // pred_fallthru
          _
      $region16: #{tpu_custom_call.1} parent=5 // pred_fallthru
        _
      %p324 = scmp.le.s32.totalorder 1, %s21
      %p325 = scmp.lt.s32.totalorder %s21, 3
      %p326 = pnand %p324, %p325
      %p327 = pneg %p326
      // Predicated region
      $region45: #{tpu_custom_call.1} parent=5 // pred_check
        _
      $region46: #{tpu_custom_call.1} parent=5 // pred_check_branch
        %329 = sbr.rel (%p326) target = $region48
      $region47: #{tpu_custom_call.1} parent=5 // pred_region
        %s330 = ssub.s32 %s21, 1
        %p331 = scmp.lt.s32.totalorder %s26, 1
        %s332 = scalar_select %p331, %s26, 1
        %s333 = smul.addr %s332, 2
        %s334 = smul.addr %s333, 8
        %s335 = scalar_lea.vmem %s0, %s334
        %p336 = pneg %p47
        %p337 = pneg %p44
        %p338 = scmp.lt.s32.totalorder %s26, 1
        %s339 = scalar_select %p338, %s26, 1
        %s340 = smul.addr %s339, 8
        %s341 = scalar_lea.vmem %s1, %s340
        %p342 = pneg %p73
        %p343 = pneg %p70
        %p344 = scmp.lt.s32.totalorder %s26, 1
        %s345 = scalar_select %p344, %s26, 1
        %s346 = smul.addr %s345, 8
        %s347 = scalar_lea.vmem %s2, %s346
        %p348 = pneg %p99
        %p349 = pneg %p96
        %p350 = scmp.lt.s32.totalorder %s26, 1
        %s351 = scalar_select %p350, %s26, 1
        %s352 = smul.addr %s351, 8
        %s353 = scalar_lea.vmem %s3, %s352
        %p354 = pneg %p125
        %p355 = pneg %p122
        %p356 = scmp.lt.s32.totalorder %s26, 1
        %s357 = scalar_select %p356, %s26, 1
        %s358 = smul.addr %s357, 8
        %s359 = scalar_lea.vmem %s4, %s358
        %p360 = pneg %p151
        %p361 = pneg %p148
        %p362 = scmp.lt.s32.totalorder %s26, 1
        %s363 = scalar_select %p362, %s26, 1
        %s364 = smul.addr %s363, 8
        %s365 = scalar_lea.vmem %s5, %s364
        %p366 = pneg %p177
        %p367 = pneg %p174
        %p368 = scmp.lt.s32.totalorder %s26, 1
        %s369 = scalar_select %p368, %s26, 1
        %s370 = smul.addr %s369, 8
        %s371 = scalar_lea.vmem %s6, %s370
        %p372 = pneg %p203
        %p373 = pneg %p200
        %p374 = pneg %p229
        %p375 = pneg %p226
        %s376 = sand.u32 %s216, 1
        %s377 = scalar_lea.sflag [#allocation3], %s376
        %s378 = sand.u32 %s216, 1
        %s379 = smul.addr %s378, 16
        %s380 = scalar_lea.vmem [#allocation2], %s379
        %p381 = pneg %p255
        %p382 = pneg %p252
        %s383 = sand.u32 %s242, 1
        %s384 = scalar_lea.sflag [#allocation5], %s383
        %s385 = sand.u32 %s242, 1
        %s386 = smul.addr %s385, 16
        %s387 = scalar_lea.vmem [#allocation4], %s386
        %p388 = scmp.lt.s32.totalorder %s26, 1
        %s389 = scalar_select %p388, %s26, 1
        %s390 = smul.addr %s389, 2
        %s391 = smul.addr %s390, 8
        %s392 = scalar_lea.vmem %s0, %s391
        %p393 = scmp.lt.s32.totalorder %s26, 1
        %s394 = scalar_select %p393, %s26, 1
        %s395 = smul.addr %s394, 8
        %s396 = scalar_lea.vmem %s1, %s395
        %p397 = scmp.lt.s32.totalorder %s26, 1
        %s398 = scalar_select %p397, %s26, 1
        %s399 = smul.addr %s398, 8
        %s400 = scalar_lea.vmem %s2, %s399
        %p401 = scmp.lt.s32.totalorder %s26, 1
        %s402 = scalar_select %p401, %s26, 1
        %s403 = smul.addr %s402, 8
        %s404 = scalar_lea.vmem %s3, %s403
        %p405 = scmp.lt.s32.totalorder %s26, 1
        %s406 = scalar_select %p405, %s26, 1
        %s407 = smul.addr %s406, 8
        %s408 = scalar_lea.vmem %s4, %s407
        %p409 = scmp.lt.s32.totalorder %s26, 1
        %s410 = scalar_select %p409, %s26, 1
        %s411 = smul.addr %s410, 8
        %s412 = scalar_lea.vmem %s5, %s411
        %p413 = scmp.lt.s32.totalorder %s26, 1
        %s414 = scalar_select %p413, %s26, 1
        %s415 = smul.addr %s414, 8
        %s416 = scalar_lea.vmem %s6, %s415
        %v417 = vld [vmem:[%s392] sm:$0xff]
        %v418 = vld [vmem:[%s392 + $0x8] sm:$0xff]
        %v419 = vlaneseq
        %v420 = vand.u32 %v419, 127
        %v421 = vadd.s32 %v420, 128
        %vm422 = vcmp.lt.s32.totalorder %v420, 0
        %v423 = vsub.s32 0, %v420
        %v424 = vsel %vm422, %v423, %v420
        %v425 = vshrl.u32 %v424, 4
        %v426 = vand.u32 %v424, 15
        %v427 = vsub.s32 0, %v426
        %v428 = vsel %vm422, %v427, %v426
        %vm429 = vcmp.lt.s32.totalorder %v421, 0
        %v430 = vsub.s32 0, %v421
        %v431 = vsel %vm429, %v430, %v421
        %v432 = vshrl.u32 %v431, 4
        %v433 = vand.u32 %v431, 15
        %v434 = vsub.s32 0, %v433
        %v435 = vsel %vm429, %v434, %v433
        %vm436 = vcmp.ne.s32.totalorder %v428, 0
        %vm437 = vcmp.ne.s32.totalorder %v435, 0
        %vm438 = vcmp.lt.s32.totalorder %v428, 0
        %vm439 = vcmp.lt.s32.totalorder %v435, 0
        %vm440 = vmand %vm438, %vm436
        %vm441 = vmand %vm439, %vm437
        %v442 = vadd.s32 %v428, 16
        %v443 = vadd.s32 %v435, 16
        %v444 = vsel %vm440, %v442, %v428
        %v445 = vsel %vm441, %v443, %v435
        %vm446 = vcmp.eq.s32.totalorder %v444, 0
        %vm447 = vcmp.eq.s32.totalorder %v445, 0
        %vm448 = vcmp.eq.s32.totalorder %v444, 15
        %vm449 = vcmp.eq.s32.totalorder %v445, 15
        %vm450 = vcmp.lt.s32.totalorder %v420, 16
        %vm451 = vcmp.lt.s32.totalorder %v421, 16
        %vm452 = vcmp.ge.s32.totalorder %v420, 240
        %vm453 = vcmp.ge.s32.totalorder %v421, 240
        %454 = vrot.lane.b32.xlu0 %v417, 17
        %v455 = vpop.permute.xlu0 %454
        %456 = vrot.lane.b32.xlu0 %v418, 17
        %v457 = vpop.permute.xlu0 %456
        %vm458 = vcmp.lt.s32.totalorder %v420, 17
        %v459 = vsel %vm458, %v455, %v457
        %v460 = vsel %vm458, %v457, %v455
        %461 = vrot.lane.b32.xlu0 %v417, 16
        %v462 = vpop.permute.xlu0 %461
        %463 = vrot.lane.b32.xlu0 %v418, 16
        %v464 = vpop.permute.xlu0 %463
        %v465 = vsel %vm450, %v462, %v464
        %v466 = vsel %vm450, %v464, %v462
        %467 = vrot.lane.b32.xlu0 %v417, 15
        %v468 = vpop.permute.xlu0 %467
        %469 = vrot.lane.b32.xlu0 %v418, 15
        %v470 = vpop.permute.xlu0 %469
        %vm471 = vcmp.lt.s32.totalorder %v420, 15
        %v472 = vsel %vm471, %v468, %v470
        %v473 = vsel %vm471, %v470, %v468
        %474 = vrot.lane.b32.xlu0 %v417, 1
        %v475 = vpop.permute.xlu0 %474
        %476 = vrot.lane.b32.xlu0 %v418, 1
        %v477 = vpop.permute.xlu0 %476
        %vm478 = vcmp.lt.s32.totalorder %v420, 1
        %v479 = vsel %vm478, %v475, %v477
        %v480 = vsel %vm478, %v477, %v475
        %481 = vrot.lane.b32.xlu0 %v417, 127
        %v482 = vpop.permute.xlu0 %481
        %483 = vrot.lane.b32.xlu0 %v418, 127
        %v484 = vpop.permute.xlu0 %483
        %vm485 = vcmp.lt.s32.totalorder %v420, 127
        %v486 = vsel %vm485, %v482, %v484
        %v487 = vsel %vm485, %v484, %v482
        %488 = vrot.lane.b32.xlu0 %v417, 113
        %v489 = vpop.permute.xlu0 %488
        %490 = vrot.lane.b32.xlu0 %v418, 113
        %v491 = vpop.permute.xlu0 %490
        %vm492 = vcmp.lt.s32.totalorder %v420, 113
        %v493 = vsel %vm492, %v489, %v491
        %v494 = vsel %vm492, %v491, %v489
        %495 = vrot.lane.b32.xlu0 %v417, 112
        %v496 = vpop.permute.xlu0 %495
        %497 = vrot.lane.b32.xlu0 %v418, 112
        %v498 = vpop.permute.xlu0 %497
        %vm499 = vcmp.lt.s32.totalorder %v420, 112
        %v500 = vsel %vm499, %v496, %v498
        %v501 = vsel %vm499, %v498, %v496
        %502 = vrot.lane.b32.xlu0 %v417, 111
        %v503 = vpop.permute.xlu0 %502
        %504 = vrot.lane.b32.xlu0 %v418, 111
        %v505 = vpop.permute.xlu0 %504
        %vm506 = vcmp.lt.s32.totalorder %v420, 111
        %v507 = vsel %vm506, %v503, %v505
        %v508 = vsel %vm506, %v505, %v503
        %v509 = vsel %vm446, 1, 0
        %v510 = vsel %vm447, 1, 0
        %vm511 = vcmp.eq.s32.totalorder %v509, 1
        %vm512 = vcmp.eq.s32.totalorder %v510, 1
        %v513 = vsel %vm511, %v473, %v460
        %v514 = vsel %vm512, %v472, %v459
        %v515 = vsel %vm448, 1, 0
        %v516 = vsel %vm449, 1, 0
        %vm517 = vcmp.eq.s32.totalorder %v515, 1
        %vm518 = vcmp.eq.s32.totalorder %v516, 1
        %v519 = vsel %vm517, %v460, %v473
        %v520 = vsel %vm518, %v459, %v472
        %v521 = vsel %vm511, %v486, %v480
        %v522 = vsel %vm512, %v487, %v479
        %v523 = vsel %vm517, %v480, %v486
        %v524 = vsel %vm518, %v479, %v487
        %v525 = vsel %vm511, %v507, %v493
        %v526 = vsel %vm512, %v508, %v494
        %v527 = vsel %vm517, %v493, %v507
        %v528 = vsel %vm518, %v494, %v508
        %v529 = vsel %vm450, 1, 0
        %v530 = vsel %vm451, 1, 0
        %vm531 = vcmp.eq.s32.totalorder %v529, 1
        %vm532 = vcmp.eq.s32.totalorder %v530, 1
        %v533 = vsel %vm531, %v525, %v513
        %v534 = vsel %vm532, %v526, %v514
        %v535 = vsel %vm452, 1, 0
        %v536 = vsel %vm453, 1, 0
        %vm537 = vcmp.eq.s32.totalorder %v535, 1
        %vm538 = vcmp.eq.s32.totalorder %v536, 1
        %v539 = vsel %vm537, %v513, %v525
        %v540 = vsel %vm538, %v514, %v526
        %v541 = vsel %vm531, %v500, %v466
        %v542 = vsel %vm532, %v501, %v465
        %v543 = vsel %vm537, %v466, %v500
        %v544 = vsel %vm538, %v465, %v501
        %v545 = vsel %vm531, %v527, %v519
        %v546 = vsel %vm532, %v528, %v520
        %v547 = vsel %vm537, %v519, %v527
        %v548 = vsel %vm538, %v520, %v528
        %v549 = vld [vmem:[%s396] sm:$0xff]
        %551 = vset.pattern.permute.xlu0 0
        %552 = vperm.xlu0 %551, %v549
        %v553 = vpop.permute.xlu0 %552
        %v555 = vmul.f32 %v533, %v553
        %v556 = vmul.f32 %v534, %v553
        %557 = vset.pattern.permute.xlu0 1
        %558 = vperm.xlu0 %557, %v549
        %v559 = vpop.permute.xlu0 %558
        %v561 = vmul.f32 %v541, %v559
        %v562 = vmul.f32 %v542, %v559
        %v563 = vadd.f32 %v555, %v561
        %v564 = vadd.f32 %v556, %v562
        %565 = vset.pattern.permute.xlu0 2
        %566 = vperm.xlu0 %565, %v549
        %v567 = vpop.permute.xlu0 %566
        %v569 = vmul.f32 %v545, %v567
        %v570 = vmul.f32 %v546, %v567
        %v571 = vadd.f32 %v563, %v569
        %v572 = vadd.f32 %v564, %v570
        %573 = vset.pattern.permute.xlu0 3
        %574 = vperm.xlu0 %573, %v549
        %v575 = vpop.permute.xlu0 %574
        %v577 = vmul.f32 %v521, %v575
        %v578 = vmul.f32 %v522, %v575
        %v579 = vadd.f32 %v571, %v577
        %v580 = vadd.f32 %v572, %v578
        %581 = vset.pattern.permute.xlu0 4
        %582 = vperm.xlu0 %581, %v549
        %v583 = vpop.permute.xlu0 %582
        %v585 = vmul.f32 %v417, %v583
        %v586 = vmul.f32 %v418, %v583
        %v587 = vadd.f32 %v579, %v585
        %v588 = vadd.f32 %v580, %v586
        %589 = vset.pattern.permute.xlu0 5
        %590 = vperm.xlu0 %589, %v549
        %v591 = vpop.permute.xlu0 %590
        %v593 = vmul.f32 %v523, %v591
        %v594 = vmul.f32 %v524, %v591
        %v595 = vadd.f32 %v587, %v593
        %v596 = vadd.f32 %v588, %v594
        %597 = vset.pattern.permute.xlu0 6
        %598 = vperm.xlu0 %597, %v549
        %v599 = vpop.permute.xlu0 %598
        %v601 = vmul.f32 %v539, %v599
        %v602 = vmul.f32 %v540, %v599
        %v603 = vadd.f32 %v595, %v601
        %v604 = vadd.f32 %v596, %v602
        %605 = vset.pattern.permute.xlu0 7
        %606 = vperm.xlu0 %605, %v549
        %v607 = vpop.permute.xlu0 %606
        %v609 = vmul.f32 %v543, %v607
        %v610 = vmul.f32 %v544, %v607
        %v611 = vadd.f32 %v603, %v609
        %v612 = vadd.f32 %v604, %v610
        %613 = vset.pattern.permute.xlu0 8
        %614 = vperm.xlu0 %613, %v549
        %v615 = vpop.permute.xlu0 %614
        %v617 = vmul.f32 %v547, %v615
        %v618 = vmul.f32 %v548, %v615
        %v619 = vadd.f32 %v611, %v617
        %v620 = vadd.f32 %v612, %v618
        %v621 = vld [vmem:[%s400] sm:$0xff]
        %623 = vset.pattern.permute.xlu0 0
        %624 = vperm.xlu0 %623, %v621
        %v625 = vpop.permute.xlu0 %624
        %v627 = vadd.f32 %v619, %v625
        %v628 = vadd.f32 %v620, %v625
        %v629 = vrot.slane %v627, 5
        %v630 = vrot.slane %v628, 5
        %v631 = vld [vmem:[%s404] sm:$0xff]
        %633 = vset.pattern.permute.xlu0 0
        %634 = vperm.xlu0 %633, %v631
        %v635 = vpop.permute.xlu0 %634
        %v637 = vmul.f32 %v629, %v635
        %v638 = vmul.f32 %v630, %v635
        %v639 = vld [vmem:[%s412] sm:$0xff]
        %641 = vset.pattern.permute.xlu0 0
        %642 = vperm.xlu0 %641, %v639
        %v643 = vpop.permute.xlu0 %642
        %v645 = vmul.f32 %v629, %v643
        %v646 = vmul.f32 %v630, %v643
        %v647 = vrot.slane %v627, 6
        %v648 = vrot.slane %v628, 6
        %649 = vset.pattern.permute.xlu0 1
        %650 = vperm.xlu0 %649, %v631
        %v651 = vpop.permute.xlu0 %650
        %v653 = vmul.f32 %v647, %v651
        %v654 = vmul.f32 %v648, %v651
        %655 = vset.pattern.permute.xlu0 1
        %656 = vperm.xlu0 %655, %v639
        %v657 = vpop.permute.xlu0 %656
        %v659 = vmul.f32 %v647, %v657
        %v660 = vmul.f32 %v648, %v657
        %v661 = vadd.f32 %v637, %v653
        %v662 = vadd.f32 %v638, %v654
        %v663 = vadd.f32 %v645, %v659
        %v664 = vadd.f32 %v646, %v660
        %v665 = vrot.slane %v627, 7
        %v666 = vrot.slane %v628, 7
        %667 = vset.pattern.permute.xlu0 2
        %668 = vperm.xlu0 %667, %v631
        %v669 = vpop.permute.xlu0 %668
        %v671 = vmul.f32 %v665, %v669
        %v672 = vmul.f32 %v666, %v669
        %673 = vset.pattern.permute.xlu0 2
        %674 = vperm.xlu0 %673, %v639
        %v675 = vpop.permute.xlu0 %674
        %v677 = vmul.f32 %v665, %v675
        %v678 = vmul.f32 %v666, %v675
        %v679 = vadd.f32 %v661, %v671
        %v680 = vadd.f32 %v662, %v672
        %v681 = vadd.f32 %v663, %v677
        %v682 = vadd.f32 %v664, %v678
        %683 = vset.pattern.permute.xlu0 3
        %684 = vperm.xlu0 %683, %v631
        %v685 = vpop.permute.xlu0 %684
        %v687 = vmul.f32 %v627, %v685
        %v688 = vmul.f32 %v628, %v685
        %689 = vset.pattern.permute.xlu0 3
        %690 = vperm.xlu0 %689, %v639
        %v691 = vpop.permute.xlu0 %690
        %v693 = vmul.f32 %v627, %v691
        %v694 = vmul.f32 %v628, %v691
        %v695 = vadd.f32 %v679, %v687
        %v696 = vadd.f32 %v680, %v688
        %v697 = vadd.f32 %v681, %v693
        %v698 = vadd.f32 %v682, %v694
        %v699 = vrot.slane %v627, 1
        %v700 = vrot.slane %v628, 1
        %701 = vset.pattern.permute.xlu0 4
        %702 = vperm.xlu0 %701, %v631
        %v703 = vpop.permute.xlu0 %702
        %v705 = vmul.f32 %v699, %v703
        %v706 = vmul.f32 %v700, %v703
        %707 = vset.pattern.permute.xlu0 4
        %708 = vperm.xlu0 %707, %v639
        %v709 = vpop.permute.xlu0 %708
        %v711 = vmul.f32 %v699, %v709
        %v712 = vmul.f32 %v700, %v709
        %v713 = vadd.f32 %v695, %v705
        %v714 = vadd.f32 %v696, %v706
        %v715 = vadd.f32 %v697, %v711
        %v716 = vadd.f32 %v698, %v712
        %v717 = vrot.slane %v627, 2
        %v718 = vrot.slane %v628, 2
        %719 = vset.pattern.permute.xlu0 5
        %720 = vperm.xlu0 %719, %v631
        %v721 = vpop.permute.xlu0 %720
        %v723 = vmul.f32 %v717, %v721
        %v724 = vmul.f32 %v718, %v721
        %725 = vset.pattern.permute.xlu0 5
        %726 = vperm.xlu0 %725, %v639
        %v727 = vpop.permute.xlu0 %726
        %v729 = vmul.f32 %v717, %v727
        %v730 = vmul.f32 %v718, %v727
        %v731 = vadd.f32 %v713, %v723
        %v732 = vadd.f32 %v714, %v724
        %v733 = vadd.f32 %v715, %v729
        %v734 = vadd.f32 %v716, %v730
        %v735 = vrot.slane %v627, 3
        %v736 = vrot.slane %v628, 3
        %737 = vset.pattern.permute.xlu0 6
        %738 = vperm.xlu0 %737, %v631
        %v739 = vpop.permute.xlu0 %738
        %v741 = vmul.f32 %v735, %v739
        %v742 = vmul.f32 %v736, %v739
        %743 = vset.pattern.permute.xlu0 6
        %744 = vperm.xlu0 %743, %v639
        %v745 = vpop.permute.xlu0 %744
        %v747 = vmul.f32 %v735, %v745
        %v748 = vmul.f32 %v736, %v745
        %v749 = vadd.f32 %v731, %v741
        %v750 = vadd.f32 %v732, %v742
        %v751 = vadd.f32 %v733, %v747
        %v752 = vadd.f32 %v734, %v748
        %v753 = vld [vmem:[%s408] sm:$0xff]
        %755 = vset.pattern.permute.xlu0 0
        %756 = vperm.xlu0 %755, %v753
        %v757 = vpop.permute.xlu0 %756
        %v759 = vadd.f32 %v749, %v757
        %v760 = vadd.f32 %v750, %v757
        %v761 = vld [vmem:[%s416] sm:$0xff]
        %763 = vset.pattern.permute.xlu0 0
        %764 = vperm.xlu0 %763, %v761
        %v765 = vpop.permute.xlu0 %764
        %v767 = vadd.f32 %v751, %v765
        %v768 = vadd.f32 %v752, %v765
        %v769 = vtanh.pop %v767
        %v770 = vtanh.pop %v768
        %v771 = vadd.f32 %v769, 1.0
        %v772 = vadd.f32 %v770, 1.0
        %v773 = vmul.f32 %v771, 6.0
        %v774 = vmul.f32 %v772, 6.0
        %v775 = vadd.f32 %v773, -10.0
        %v776 = vadd.f32 %v774, -10.0
        %777 = vst [vmem:[%s380] sm:$0xff] %v759
        %778 = vst [vmem:[%s380 + $0x8] sm:$0xff] %v760
        %v779 = vmul.f32 %v775, 1.442695
        %v780 = vpow.pop %v779
        %v781 = vmul.f32 %v776, 1.442695
        %v782 = vpow.pop %v781
        %783 = vst [vmem:[%s387] sm:$0xff] %v780
        %784 = vst [vmem:[%s387 + $0x8] sm:$0xff] %v782
        %s785 = sand.u32 %s216, 1
        %s786 = scalar_lea.sflag [#allocation3], %s785
        %s787 = sand.u32 %s216, 1
        %s788 = smul.addr %s787, 16
        %s789 = scalar_lea.vmem [#allocation2], %s788
        %s790 = sand.u32 %s242, 1
        %s791 = scalar_lea.sflag [#allocation5], %s790
        %s792 = sand.u32 %s242, 1
        %s793 = smul.addr %s792, 16
        %s794 = scalar_lea.vmem [#allocation4], %s793
        // Predicated region
        $region49: #{tpu_custom_call.1} parent=47 // pred_check
          %p795 = pneg %p226
        $region50: #{tpu_custom_call.1} parent=47 // pred_check_branch
          %797 = sbr.rel (%p795) target = $region52
        $region51: #{tpu_custom_call.1} parent=47 // pred_region
          %s799 = ssub.s32 256, 256
          %800 = vsyncadd %s786, %s799
          %s801 = smul.addr %s26, 2
          %s802 = smul.addr %s801, 128
          %s803 = scalar_lea.hbm %s7, %s802
          %s805 = sshll.u32 %s789, 4
          %s806 = int_to_ptr.vmem [resolvable:$true] %s805
          %808 = dma.vmem_to_hbm [thread:$0]  %s806, 256, %s803, %s786
        $region52: #{tpu_custom_call.1} parent=47 // pred_fallthru
          _
        // Predicated region
        $region53: #{tpu_custom_call.1} parent=47 // pred_check
          %p809 = pneg %p252
        $region54: #{tpu_custom_call.1} parent=47 // pred_check_branch
          %811 = sbr.rel (%p809) target = $region56
        $region55: #{tpu_custom_call.1} parent=47 // pred_region
          %s813 = ssub.s32 256, 256
          %814 = vsyncadd %s791, %s813
          %s815 = smul.addr %s26, 2
          %s816 = smul.addr %s815, 128
          %s817 = scalar_lea.hbm %s8, %s816
          %s819 = sshll.u32 %s794, 4
          %s820 = int_to_ptr.vmem [resolvable:$true] %s819
          %822 = dma.vmem_to_hbm [thread:$0]  %s820, 256, %s817, %s791
        $region56: #{tpu_custom_call.1} parent=47 // pred_fallthru
          _
      $region48: #{tpu_custom_call.1} parent=5 // pred_fallthru
        _
      %p823 = scmp.le.s32.totalorder 2, %s21
      // Predicated region
      $region57: #{tpu_custom_call.1} parent=5 // pred_check
        %p824 = pneg %p823
      $region58: #{tpu_custom_call.1} parent=5 // pred_check_branch
        %826 = sbr.rel (%p824) target = $region60
      $region59: #{tpu_custom_call.1} parent=5 // pred_region
        %s827 = ssub.s32 %s21, 2
        // Predicated region
        $region61: #{tpu_custom_call.1} parent=59 // pred_check
          %p828 = pneg %p232
        $region62: #{tpu_custom_call.1} parent=59 // pred_check_branch
          %830 = sbr.rel (%p828) target = $region64
        $region63: #{tpu_custom_call.1} parent=59 // pred_region
          %s831 = sand.u32 %s217, 1
          %s832 = scalar_lea.sflag [#allocation3], %s831
          %s833 = sand.u32 %s217, 1
          %s834 = smul.addr %s833, 16
          %s835 = scalar_lea.vmem [#allocation2], %s834
          %836 = dma.done %s832, 256
        $region64: #{tpu_custom_call.1} parent=59 // pred_fallthru
          _
        // Predicated region
        $region65: #{tpu_custom_call.1} parent=59 // pred_check
          %p837 = pneg %p258
        $region66: #{tpu_custom_call.1} parent=59 // pred_check_branch
          %839 = sbr.rel (%p837) target = $region68
        $region67: #{tpu_custom_call.1} parent=59 // pred_region
          %s840 = sand.u32 %s243, 1
          %s841 = scalar_lea.sflag [#allocation5], %s840
          %s842 = sand.u32 %s243, 1
          %s843 = smul.addr %s842, 16
          %s844 = scalar_lea.vmem [#allocation4], %s843
          %845 = dma.done %s841, 256
        $region68: #{tpu_custom_call.1} parent=59 // pred_fallthru
          _
      $region60: #{tpu_custom_call.1} parent=5 // pred_fallthru
        _
    $region6: #{tpu_custom_call.1} parent=1 // loop_footer
      %s25 = sadd.s32 1, %s21
    $region7: #{tpu_custom_call.1} parent=1 // loop_footer_branch
      %20 = sbr.rel target = $region3
    $region8: #{tpu_custom_call.1} parent=1 // loop_exit
      _
    %846 = vsyncpa [#allocation3], 1
    %s847 = scalar_lea.sflag [#allocation3], 1
    %848 = vsyncpa %s847, 1
    %849 = vsyncpa [#allocation5], 1
    %s850 = scalar_lea.sflag [#allocation5], 1
    %851 = vsyncpa %s850, 1

</llo_original>
